<compile_context>
chip_gen: v7x
topology: tpu7x:2x2x1
jax: 0.10.0
libtpu: 0.0.40
codegen_flags: <defaults>
</compile_context>

<pallas_src>
import jax
import jax.numpy as jnp
from jax.experimental import pallas as pl
from jax.experimental.pallas import tpu as pltpu

_LANE = 128
_SUB = 16          # sublane granularity safe for bf16-packed tiles


def _round_up(a, b):
    return -(-a // b) * b


def _vmem_capacity_bytes():
    try:
        cap = int(getattr(pltpu.get_tpu_info(), "vmem_capacity_bytes", 0))
        if cap > 0:
            return cap
    except Exception:
        pass
    return 64 * 1024 * 1024  # conservative default (v7x per-core VMEM)


# ----------------------------------------------------------------------------
# Kernels
# ----------------------------------------------------------------------------
def edge_kernel(x_ref, h_ref, theta_ref, o_ref, acc_ref):
    """Pass 1 (reduction over N-tiles): accumulate A = H^T [X | 1] (E, Cp);
    on the last grid step finalize Ye = De^{-1} A Theta into (E, Fp)."""
    i = pl.program_id(0)

    @pl.when(i == 0)
    def _():
        acc_ref[...] = jnp.zeros_like(acc_ref)

    h = h_ref[...].astype(jnp.float32)               # (tn, E) bf16 -> f32
    # Contract the node axis of both operands directly on the MXU (no
    # transposed copy of H). The last column of x is all-ones, so column
    # Cp-1 of the accumulator carries the hyperedge degrees.
    acc_ref[...] += jax.lax.dot_general(
        h, x_ref[...],
        dimension_numbers=(((0,), (0,)), ((), ())),
        preferred_element_type=jnp.float32)          # (E, Cp)

    @pl.when(i == pl.num_programs(0) - 1)
    def _():
        a = acc_ref[...]
        de = a[:, -1:]                               # hyperedge degrees (E, 1)
        de_inv = jnp.where(de > 0, 1.0 / de, 0.0)    # guard empty hyperedges
        o_ref[...] = jnp.dot(a * de_inv, theta_ref[...],
                             preferred_element_type=jnp.float32)   # (E, Fp)


def node_kernel(h_ref, edge_ref, bias_ref, o_ref):
    """Pass 2 (per N-tile, parallel): Out_tile = Dn^{-1} (H_tile @ Ye) + b."""
    h = h_ref[...].astype(jnp.float32)               # (tn, E)
    dn = jnp.sum(h, axis=1, keepdims=True)           # (tn, 1) node degrees
    dn_inv = jnp.where(dn > 0, 1.0 / dn, 0.0)        # guard isolated nodes
    y = jnp.dot(h, edge_ref[...], preferred_element_type=jnp.float32)
    o_ref[...] = y * dn_inv + bias_ref[...]          # lane-dense (tn, Fp)


def fused_kernel(x_ref, h_ref, theta_ref, bias_ref, o_ref):
    """Single-launch path when everything fits in VMEM: H read from HBM once."""
    h = h_ref[...].astype(jnp.float32)               # (Np, E)
    a = jax.lax.dot_general(
        h, x_ref[...],
        dimension_numbers=(((0,), (0,)), ((), ())),
        preferred_element_type=jnp.float32)          # (E, Cp)
    de = a[:, -1:]
    de_inv = jnp.where(de > 0, 1.0 / de, 0.0)
    edge_ft = jnp.dot(a * de_inv, theta_ref[...],
                      preferred_element_type=jnp.float32)          # (E, Fp)
    dn = jnp.sum(h, axis=1, keepdims=True)
    dn_inv = jnp.where(dn > 0, 1.0 / dn, 0.0)
    y = jnp.dot(h, edge_ft, preferred_element_type=jnp.float32)    # (Np, Fp)
    o_ref[...] = y * dn_inv + bias_ref[...]


# ----------------------------------------------------------------------------
# VMEM-aware tiling
# ----------------------------------------------------------------------------
def _pass1_bytes(t, Cp, E, Fp):
    # double-buffered x (f32) + H (bf16) tiles, (E,Cp) f32 accumulator,
    # resident (E,Fp) output block and (Cp,Fp) theta block.
    return 2 * t * (Cp * 4 + E * 2) + E * (Cp + Fp) * 4 + Cp * Fp * 4


def _pass2_bytes(t, E, Fp):
    # double-buffered H (bf16) + output (f32) tiles, resident edge/bias blocks.
    return 2 * t * (E * 2 + Fp * 4) + (E + 1) * Fp * 4


def _fused_bytes(n_pad, Cp, E, Fp):
    return n_pad * (Cp * 4 + E * 2 + Fp * 4) + (Cp + E + 1) * Fp * 4 + E * Cp * 4


def _choose_tile_n(N, Cp, E, Fp, budget):
    cap = _round_up(max(N, _SUB), 256)   # never pad a small N up to a huge tile
    for t in (2048, 1024, 512, 256, 128, 64, 32, 16):
        t = min(t, cap)
        if max(_pass1_bytes(t, Cp, E, Fp), _pass2_bytes(t, E, Fp)) <= budget:
            return t
    # TODO(synk): if even tile_n=16 blows the budget (very large E), add an
    # E-tiling grid axis instead of relying on the compiler to squeeze it in.
    return _SUB


# ----------------------------------------------------------------------------
# Wrapper
# ----------------------------------------------------------------------------
def dahh_conv(x, H, theta, bias=None, tile_n=None, fuse=None):
    """DAHHConv forward: Dn^{-1} H De^{-1} H^T (X Theta) + bias."""
    N, C = x.shape
    E = H.shape[1]
    F = theta.shape[1]

    Fp = _round_up(F, _LANE)
    Cp = _round_up(C + 1, _LANE)      # +1: ones column carrying edge degrees

    vmem_cap = _vmem_capacity_bytes()
    vmem_limit = min(int(vmem_cap * 0.7), 100 * 1024 * 1024)
    budget = int(vmem_limit * 0.8)

    # Lane-dense, degree-augmented operands. Padding columns are zero (they
    # contribute nothing); padded output columns/rows are sliced off below.
    x_aug = jnp.concatenate(
        [x.astype(jnp.float32),
         jnp.zeros((N, Cp - C - 1), jnp.float32),
         jnp.ones((N, 1), jnp.float32)], axis=1)                   # (N, Cp)
    h_bf = H.astype(jnp.bfloat16)     # exact for a 0/1 incidence matrix
    theta_p = jnp.zeros((Cp, Fp), jnp.float32).at[:C, :F].set(
        theta.astype(jnp.float32))
    bias_p = jnp.zeros((1, Fp), jnp.float32)
    if bias is not None:
        bias_p = bias_p.at[0, :F].set(bias.astype(jnp.float32))

    if fuse is None:
        fuse = _fused_bytes(_round_up(N, _SUB), Cp, E, Fp) <= budget // 2

    if fuse:
        n_pad = _round_up(N, _SUB)
        if n_pad > N:   # zero rows: ones column is zero there too -> no effect
            x_aug = jnp.pad(x_aug, ((0, n_pad - N), (0, 0)))
            h_bf = jnp.pad(h_bf, ((0, n_pad - N), (0, 0)))

        out = pl.pallas_call(
            fused_kernel,
            out_shape=jax.ShapeDtypeStruct((n_pad, Fp), jnp.float32),
            grid=(1,),
            in_specs=[
                pl.BlockSpec((n_pad, Cp), lambda i: (0, 0)),
                pl.BlockSpec((n_pad, E), lambda i: (0, 0)),
                pl.BlockSpec((Cp, Fp), lambda i: (0, 0)),
                pl.BlockSpec((1, Fp), lambda i: (0, 0)),
            ],
            out_specs=pl.BlockSpec((n_pad, Fp), lambda i: (0, 0)),
            compiler_params=pltpu.CompilerParams(
                dimension_semantics=("arbitrary",),
                vmem_limit_bytes=vmem_limit),
        )(x_aug, h_bf, theta_p, bias_p)
        return out[:N, :F]

    # -------- two-pass path, tiled over N --------
    if tile_n is None:
        tile_n = _choose_tile_n(N, Cp, E, Fp, budget)
    else:
        tile_n = max(_SUB, _round_up(min(tile_n, _round_up(N, _SUB)), _SUB))
    n_pad = _round_up(N, tile_n)
    if n_pad > N:       # zero rows contribute nothing to Ye / degrees
        x_aug = jnp.pad(x_aug, ((0, n_pad - N), (0, 0)))
        h_bf = jnp.pad(h_bf, ((0, n_pad - N), (0, 0)))
    num_tiles = n_pad // tile_n

    # Pass 1: hyperedge features (E, Fp). Reduction over N-tiles -> "arbitrary".
    # TODO(synk): on v7x, split this reduction across the two TensorCores
    # (leading size-2 "parallel" axis with per-core partial accumulators).
    edge_ft = pl.pallas_call(
        edge_kernel,
        out_shape=jax.ShapeDtypeStruct((E, Fp), jnp.float32),
        grid=(num_tiles,),
        in_specs=[
            pl.BlockSpec((tile_n, Cp), lambda i: (i, 0)),
            pl.BlockSpec((tile_n, E), lambda i: (i, 0)),
            pl.BlockSpec((Cp, Fp), lambda i: (0, 0)),
        ],
        out_specs=pl.BlockSpec((E, Fp), lambda i: (0, 0)),
        scratch_shapes=[pltpu.VMEM((E, Cp), jnp.float32)],
        compiler_params=pltpu.CompilerParams(
            dimension_semantics=("arbitrary",),
            vmem_limit_bytes=vmem_limit),
    )(x_aug, h_bf, theta_p)

    # Pass 2: node features (n_pad, Fp). Independent N-tiles -> "parallel".
    out = pl.pallas_call(
        node_kernel,
        out_shape=jax.ShapeDtypeStruct((n_pad, Fp), jnp.float32),
        grid=(num_tiles,),
        in_specs=[
            pl.BlockSpec((tile_n, E), lambda i: (i, 0)),
            pl.BlockSpec((E, Fp), lambda i: (0, 0)),
            pl.BlockSpec((1, Fp), lambda i: (0, 0)),
        ],
        out_specs=pl.BlockSpec((tile_n, Fp), lambda i: (i, 0)),
        compiler_params=pltpu.CompilerParams(
            dimension_semantics=("parallel",),
            vmem_limit_bytes=vmem_limit),
    )(h_bf, edge_ft, bias_p)
    return out[:N, :F]


def reference(x, H, theta, bias):
    xt = x @ theta
    de_inv = 1.0 / jnp.sum(H, axis=0)            # (E,)
    edge_ft = (H * de_inv[None, :]).T @ xt       # (E, F)
    dn_inv = 1.0 / jnp.sum(H, axis=1)            # (N,)
    node_ft = (H * dn_inv[:, None]) @ edge_ft    # (N, F)
    return node_ft + bias[None, :]


if __name__ == "__main__":
    key = jax.random.PRNGKey(0)
    k_x, k_h, k_theta = jax.random.split(key, 3)

    N, E = 64, 32          # nodes, hyperedges
    in_ch, out_ch = 16, 32

    # node features
    x = jax.random.normal(k_x, (N, in_ch), dtype=jnp.float32)

    # binary incidence matrix; guarantee every node / hyperedge has degree > 0
    H = (jax.random.uniform(k_h, (N, E)) < 0.25).astype(jnp.float32)
    H = H.at[jnp.arange(N), jnp.arange(N) % E].set(1.0)
    H = H.at[jnp.arange(E) % N, jnp.arange(E)].set(1.0)

    # parameters: xavier_uniform theta, zero bias (deterministic)
    bound = jnp.sqrt(6.0 / (in_ch + out_ch))
    theta = jax.random.uniform(
        k_theta, (in_ch, out_ch), minval=-bound, maxval=bound,
        dtype=jnp.float32)
    bias = jnp.zeros((out_ch,), dtype=jnp.float32)

    ref = reference(x, H, theta, bias)

    # Auto path: the toy problem fits in VMEM -> single fused launch.
    out_fused = dahh_conv(x, H, theta, bias)
    jax.block_until_ready(out_fused)
    assert out_fused.shape == (N, out_ch)
    assert jnp.allclose(out_fused, ref, atol=1e-4, rtol=1e-4), \
        f"fused max abs err {jnp.max(jnp.abs(out_fused - ref))}"

    # Forced two-pass path (tile_n=32 -> 2 N-tiles): exercises the cross-tile
    # edge reduction and the parallel node pass.
    out_tiled = dahh_conv(x, H, theta, bias, tile_n=32, fuse=False)
    jax.block_until_ready(out_tiled)
    assert out_tiled.shape == (N, out_ch)
    assert jnp.allclose(out_tiled, ref, atol=1e-4, rtol=1e-4), \
        f"tiled max abs err {jnp.max(jnp.abs(out_tiled - ref))}"

    print("KERNEL_OK")
</pallas_src>

<mosaic_0001>
module attributes {stable_mosaic.version = 11 : i64} {
  func.func @fused_kernel(%arg0: i32, %arg1: memref<64x128xf32, #tpu.memory_space<vmem>>, %arg2: memref<64x32xbf16, #tpu.memory_space<vmem>>, %arg3: memref<128x128xf32, #tpu.memory_space<vmem>>, %arg4: memref<1x128xf32, #tpu.memory_space<vmem>>, %arg5: memref<64x128xf32, #tpu.memory_space<vmem>>) attributes {dimension_semantics = [#tpu.dimension_semantics<arbitrary>], iteration_bounds = array<i64: 1>, scalar_prefetch = 0 : i64, scratch_operands = 0 : i64, tpu.core_type = #tpu.core_type<tc>, window_params = [{pipeline_mode = #tpu.pipeline_mode<synchronous>, transform_indices = @transform_0, window_bounds = array<i64: 64, 128>}, {pipeline_mode = #tpu.pipeline_mode<synchronous>, transform_indices = @transform_1, window_bounds = array<i64: 64, 32>}, {pipeline_mode = #tpu.pipeline_mode<synchronous>, transform_indices = @transform_2, window_bounds = array<i64: 128, 128>}, {pipeline_mode = #tpu.pipeline_mode<synchronous>, transform_indices = @transform_3, window_bounds = array<i64: 1, 128>}, {pipeline_mode = #tpu.pipeline_mode<synchronous>, transform_indices = @transform_4, window_bounds = array<i64: 64, 128>}]} {
    %c0 = arith.constant 0 : index
    %c0_0 = arith.constant 0 : index
    %0 = vector.load %arg2[%c0, %c0_0] : memref<64x32xbf16, #tpu.memory_space<vmem>>, vector<64x32xbf16>
    %1 = arith.extf %0 : vector<64x32xbf16> to vector<64x32xf32>
    %c0_1 = arith.constant 0 : index
    %c0_2 = arith.constant 0 : index
    %2 = vector.load %arg1[%c0_1, %c0_2] : memref<64x128xf32, #tpu.memory_space<vmem>>, vector<64x128xf32>
    %cst = arith.constant dense<0.000000e+00> : vector<32x128xf32>
    %3 = tpu.matmul %1, %2, %cst {dimension_numbers = #tpu.dot_dimension_numbers<[0], [0], [1], [1], [0, 1, 1, 1], [], []>} : vector<64x32xf32>, vector<64x128xf32>, vector<32x128xf32> -> vector<32x128xf32>
    %4 = vector.extract_strided_slice %3 {offsets = [0, 127], sizes = [32, 1], strides = [1, 1]} : vector<32x128xf32> to vector<32x1xf32>
    %cst_3 = arith.constant 0.000000e+00 : f32
    %5 = vector.broadcast %cst_3 : f32 to vector<32x1xf32>
    %6 = arith.cmpf ogt, %4, %5 : vector<32x1xf32>
    %cst_4 = arith.constant 1.000000e+00 : f32
    %7 = vector.broadcast %cst_4 : f32 to vector<32x1xf32>
    %8 = arith.divf %7, %4 : vector<32x1xf32>
    %cst_5 = arith.constant 0.000000e+00 : f32
    %9 = vector.broadcast %cst_5 : f32 to vector<32x1xf32>
    %10 = arith.select %6, %8, %9 : vector<32x1xi1>, vector<32x1xf32>
    %11 = vector.broadcast %10 : vector<32x1xf32> to vector<32x128xf32>
    %12 = arith.mulf %3, %11 : vector<32x128xf32>
    %c0_6 = arith.constant 0 : index
    %c0_7 = arith.constant 0 : index
    %13 = vector.load %arg3[%c0_6, %c0_7] : memref<128x128xf32, #tpu.memory_space<vmem>>, vector<128x128xf32>
    %cst_8 = arith.constant dense<0.000000e+00> : vector<32x128xf32>
    %14 = tpu.matmul %12, %13, %cst_8 {dimension_numbers = #tpu.dot_dimension_numbers<[1], [0], [0], [1], [0, 0, 1, 1], [], []>} : vector<32x128xf32>, vector<128x128xf32>, vector<32x128xf32> -> vector<32x128xf32>
    %cst_9 = arith.constant dense<0.000000e+00> : vector<64xf32>
    %15 = vector.multi_reduction <add>, %1, %cst_9 [1] : vector<64x32xf32> to vector<64xf32>
    %16 = vector.shape_cast %15 : vector<64xf32> to vector<64x1xf32>
    %cst_10 = arith.constant 0.000000e+00 : f32
    %17 = vector.broadcast %cst_10 : f32 to vector<64x1xf32>
    %18 = arith.cmpf ogt, %16, %17 : vector<64x1xf32>
    %cst_11 = arith.constant 1.000000e+00 : f32
    %19 = vector.broadcast %cst_11 : f32 to vector<64x1xf32>
    %20 = arith.divf %19, %16 : vector<64x1xf32>
    %cst_12 = arith.constant 0.000000e+00 : f32
    %21 = vector.broadcast %cst_12 : f32 to vector<64x1xf32>
    %22 = arith.select %18, %20, %21 : vector<64x1xi1>, vector<64x1xf32>
    %cst_13 = arith.constant dense<0.000000e+00> : vector<64x128xf32>
    %23 = tpu.matmul %1, %14, %cst_13 {dimension_numbers = #tpu.dot_dimension_numbers<[1], [0], [0], [1], [0, 0, 1, 1], [], []>} : vector<64x32xf32>, vector<32x128xf32>, vector<64x128xf32> -> vector<64x128xf32>
    %24 = vector.broadcast %22 : vector<64x1xf32> to vector<64x128xf32>
    %25 = arith.mulf %23, %24 : vector<64x128xf32>
    %c0_14 = arith.constant 0 : index
    %c0_15 = arith.constant 0 : index
    %26 = vector.load %arg4[%c0_14, %c0_15] : memref<1x128xf32, #tpu.memory_space<vmem>>, vector<1x128xf32>
    %27 = vector.broadcast %26 : vector<1x128xf32> to vector<64x128xf32>
    %28 = arith.addf %25, %27 : vector<64x128xf32>
    %c0_16 = arith.constant 0 : index
    %c0_17 = arith.constant 0 : index
    %29 = vector.load %arg5[%c0_16, %c0_17] : memref<64x128xf32, #tpu.memory_space<vmem>>, vector<64x128xf32>
    tpu.vector_store %arg5[%c0_16, %c0_17], %28 {strides = array<i32>} : memref<64x128xf32, #tpu.memory_space<vmem>>, vector<64x128xf32>,
    return
  }
  func.func @transform_0(%arg0: i32) -> (i32, i32) {
    %c0_i32 = arith.constant 0 : i32
    %c0_i32_0 = arith.constant 0 : i32
    %c0_i32_1 = arith.constant 0 : i32
    return %c0_i32, %c0_i32_0 : i32, i32
  }
  func.func @transform_1(%arg0: i32) -> (i32, i32) {
    %c0_i32 = arith.constant 0 : i32
    %c0_i32_0 = arith.constant 0 : i32
    %c0_i32_1 = arith.constant 0 : i32
    return %c0_i32, %c0_i32_0 : i32, i32
  }
  func.func @transform_2(%arg0: i32) -> (i32, i32) {
    %c0_i32 = arith.constant 0 : i32
    %c0_i32_0 = arith.constant 0 : i32
    %c0_i32_1 = arith.constant 0 : i32
    return %c0_i32, %c0_i32_0 : i32, i32
  }
  func.func @transform_3(%arg0: i32) -> (i32, i32) {
    %c0_i32 = arith.constant 0 : i32
    %c0_i32_0 = arith.constant 0 : i32
    %c0_i32_1 = arith.constant 0 : i32
    return %c0_i32, %c0_i32_0 : i32, i32
  }
  func.func @transform_4(%arg0: i32) -> (i32, i32) {
    %c0_i32 = arith.constant 0 : i32
    %c0_i32_0 = arith.constant 0 : i32
    %c0_i32_1 = arith.constant 0 : i32
    return %c0_i32, %c0_i32_0 : i32, i32
  }
}

</mosaic_0001>

<llo_original>
// kernel: tpu_custom_call.1
$region0: #{tpu_custom_call.1}
  #allocation0 [shape = 'u32[]', space=smem, size = 0x4, offset = 0x4, fixed_abs, tag = 'smem constant byte address 0x4 - core index']
  #allocation1 [shape = 'u32[144,128]{1,0:T(1,128)}', space=vmem, size = 0x12000, scoped, tag = 'internal scratch']
  %s0 = inlined_call_operand.hbm [shape: f32[64,128], index: 0, kind: input, shape index: {}]
  %s1 = inlined_call_operand.vmem [shape: bf16[64,32], index: 1, kind: input, shape index: {}]
  %s2 = inlined_call_operand.hbm [shape: f32[128,128], index: 2, kind: input, shape index: {}]
  %s3 = inlined_call_operand.vmem [shape: f32[1,128], index: 3, kind: input, shape index: {}]
  %s4 = inlined_call_operand.hbm [shape: f32[64,128], index: 4, kind: output, shape index: {}]
  %s5 = sld [smem:[#allocation0]]
  $region34: #{tpu_custom_call.1} parent=0
    _
  %s7 = ssub.s32 1, %s5
  %s8 = scalar_select 0, %s7, %s5
  $region1: #{tpu_custom_call.1} parent=0
    #allocation2 [shape = 'u8[32768]{0}', space=vmem, size = 0x8000, scoped, tag = 'input window, operand 0, single buffered']
    #allocation3 [shape = 's32[1]{0}', space=sflag, size = 0x4, scoped, tag = 'scoped memory for tpu_custom_call.1']
    #allocation4 [shape = 's32[1]{0}', space=sflag, size = 0x4, scoped, tag = 'scoped memory for tpu_custom_call.1']
    #allocation5 [shape = 'u8[65536]{0}', space=vmem, size = 0x10000, scoped, tag = 'input window, operand 2, single buffered']
    #allocation6 [shape = 's32[1]{0}', space=sflag, size = 0x4, scoped, tag = 'scoped memory for tpu_custom_call.1']
    #allocation7 [shape = 'u8[32768]{0}', space=vmem, size = 0x8000, scoped, tag = 'output window, operand 0, single buffered']
    %9 = vsyncpa [#allocation3], 0
    %10 = vsyncpa [#allocation6], 0
    %11 = vsyncpa [#allocation4], 0
    // Predicated region
    $region2: #{tpu_custom_call.1} parent=1 // pred_check
      _
    $region3: #{tpu_custom_call.1} parent=1 // pred_check_branch
      %13 = sbr.rel (0) target = $region5
    $region4: #{tpu_custom_call.1} parent=1 // pred_region
      %s15 = ssub.s32 1024, 1024
      %16 = vsyncadd [#allocation3], %s15
      %s17 = sshll.u32 [#allocation2], 4
      %s18 = int_to_ptr.vmem [resolvable:$true] %s17
      %23 = dma.hbm_to_vmem [thread:$0]  %s0, 1024, %s18, [#allocation3], 128, 128, 8
    $region5: #{tpu_custom_call.1} parent=1 // pred_fallthru
      _
    // Predicated region
    $region6: #{tpu_custom_call.1} parent=1 // pred_check
      _
    $region7: #{tpu_custom_call.1} parent=1 // pred_check_branch
      %25 = sbr.rel (0) target = $region9
    $region8: #{tpu_custom_call.1} parent=1 // pred_region
      _
    $region9: #{tpu_custom_call.1} parent=1 // pred_fallthru
      _
    // Predicated region
    $region10: #{tpu_custom_call.1} parent=1 // pred_check
      _
    $region11: #{tpu_custom_call.1} parent=1 // pred_check_branch
      %27 = sbr.rel (0) target = $region13
    $region12: #{tpu_custom_call.1} parent=1 // pred_region
      %s29 = ssub.s32 2048, 2048
      %30 = vsyncadd [#allocation6], %s29
      %s31 = sshll.u32 [#allocation5], 4
      %s32 = int_to_ptr.vmem [resolvable:$true] %s31
      %37 = dma.hbm_to_vmem [thread:$0]  %s2, 2048, %s32, [#allocation6], 128, 128, 8
    $region13: #{tpu_custom_call.1} parent=1 // pred_fallthru
      _
    // Predicated region
    $region14: #{tpu_custom_call.1} parent=1 // pred_check
      _
    $region15: #{tpu_custom_call.1} parent=1 // pred_check_branch
      %39 = sbr.rel (0) target = $region17
    $region16: #{tpu_custom_call.1} parent=1 // pred_region
      _
    $region17: #{tpu_custom_call.1} parent=1 // pred_fallthru
      _
    // Predicated region
    $region18: #{tpu_custom_call.1} parent=1 // pred_check
      _
    $region19: #{tpu_custom_call.1} parent=1 // pred_check_branch
      %41 = sbr.rel (0) target = $region21
    $region20: #{tpu_custom_call.1} parent=1 // pred_region
      %42 = dma.done [#allocation3], 1024
    $region21: #{tpu_custom_call.1} parent=1 // pred_fallthru
      _
    // Predicated region
    $region22: #{tpu_custom_call.1} parent=1 // pred_check
      _
    $region23: #{tpu_custom_call.1} parent=1 // pred_check_branch
      %44 = sbr.rel (0) target = $region25
    $region24: #{tpu_custom_call.1} parent=1 // pred_region
      %45 = dma.done [#allocation6], 2048
    $region25: #{tpu_custom_call.1} parent=1 // pred_fallthru
      _
    %v46 = vld [vmem:[%s1] sm:$0xf]
    %v47 = vld [vmem:[%s1 + $0x4] sm:$0xf]
    %v48 = vld [vmem:[%s1 + $0x8] sm:$0xf]
    %v49 = vld [vmem:[%s1 + $0xc] sm:$0xf]
    %v50 = vld [vmem:[%s1 + $0x10] sm:$0xf]
    %v51 = vld [vmem:[%s1 + $0x14] sm:$0xf]
    %v52 = vld [vmem:[%s1 + $0x18] sm:$0xf]
    %v53 = vld [vmem:[%s1 + $0x1c] sm:$0xf]
    %v54 = vunpack.c.l.bf16 %v46
    %v55 = vunpack.c.l.bf16 %v47
    %v56 = vunpack.c.l.bf16 %v48
    %v57 = vunpack.c.l.bf16 %v49
    %v58 = vunpack.c.l.bf16 %v50
    %v59 = vunpack.c.l.bf16 %v51
    %v60 = vunpack.c.l.bf16 %v52
    %v61 = vunpack.c.l.bf16 %v53
    %v62 = vld [vmem:[#allocation2] sm:$0xff]
    %v63 = vld [vmem:[#allocation2 + $0x8] sm:$0xff]
    %v64 = vld [vmem:[#allocation2 + $0x10] sm:$0xff]
    %v65 = vld [vmem:[#allocation2 + $0x18] sm:$0xff]
    %v66 = vld [vmem:[#allocation2 + $0x20] sm:$0xff]
    %v67 = vld [vmem:[#allocation2 + $0x28] sm:$0xff]
    %v68 = vld [vmem:[#allocation2 + $0x30] sm:$0xff]
    %v69 = vld [vmem:[#allocation2 + $0x38] sm:$0xff]
    %70 = vxpose.xlu0.b32.start [1/16] %v54, 128
    %71 = vxpose.xlu0.b32.cont [2/16] %v55, 128
    %72 = vxpose.xlu0.b32.cont [3/16] %v56, 128
    %73 = vxpose.xlu0.b32.cont [4/16] %v57, 128
    %74 = vxpose.xlu0.b32.cont [5/16] %v58, 128
    %75 = vxpose.xlu0.b32.cont [6/16] %v59, 128
    %76 = vxpose.xlu0.b32.cont [7/16] %v60, 128
    %77 = vxpose.xlu0.b32.cont [8/16] %v61, 128
    %78 = vxpose.xlu0.b32.cont [9/16] 0.0, 128
    %79 = vxpose.xlu0.b32.cont [10/16] 0.0, 128
    %80 = vxpose.xlu0.b32.cont [11/16] 0.0, 128
    %81 = vxpose.xlu0.b32.cont [12/16] 0.0, 128
    %82 = vxpose.xlu0.b32.cont [13/16] 0.0, 128
    %83 = vxpose.xlu0.b32.cont [14/16] 0.0, 128
    %84 = vxpose.xlu0.b32.cont [15/16] 0.0, 128
    %85 = vxpose.xlu0.b32.end [16/16] 0.0, 128
    %v86 = vpop.trf.xlu0
    %v87 = vpop.trf.xlu0
    %v88 = vpop.trf.xlu0
    %v89 = vpop.trf.xlu0
    %v90 = vpop.trf.xlu0
    %v91 = vpop.trf.xlu0
    %v92 = vpop.trf.xlu0
    %v93 = vpop.trf.xlu0
    %v94 = vpop.trf.xlu0
    %v95 = vpop.trf.xlu0
    %v96 = vpop.trf.xlu0
    %v97 = vpop.trf.xlu0
    %v98 = vpop.trf.xlu0
    %v99 = vpop.trf.xlu0
    %v100 = vpop.trf.xlu0
    %v101 = vpop.trf.xlu0
    %vm102 = vcmask 523264
    %v104 = vsel %vm102, %v86, 0
    %v107 = vsel %vm102, %v87, 0
    %v110 = vsel %vm102, %v88, 0
    %v113 = vsel %vm102, %v89, 0
    %115 = vmatprep.subr.mxu0 0.0
    %116 = vmatpush1.msra.mxu0 %v62
    %117 = vmatprep.subr.mxu0 0.0
    %118 = vmatpush1.msra.mxu0 %v63
    %119 = vmatprep.subr.mxu0 0.0
    %120 = vmatpush1.msra.mxu0 %v64
    %121 = vmatprep.subr.mxu0 0.0
    %122 = vmatpush1.msra.mxu0 %v65
    %123 = vmatprep.subr.mxu0 0.0
    %124 = vmatpush1.msra.mxu0 %v66
    %125 = vmatprep.subr.mxu0 0.0
    %126 = vmatpush1.msra.mxu0 %v67
    %127 = vmatprep.subr.mxu0 0.0
    %128 = vmatpush1.msra.mxu0 %v68
    %129 = vmatprep.subr.mxu0 0.0
    %130 = vmatpush1.msra.mxu0 %v69
    %131 = vmatprep.subr.mxu0 0.0
    %132 = vmatpush1.msra.mxu0 0.0
    %133 = vmatprep.subr.mxu0 0.0
    %134 = vmatpush1.msra.mxu0 0.0
    %135 = vmatprep.subr.mxu0 0.0
    %136 = vmatpush1.msra.mxu0 0.0
    %137 = vmatprep.subr.mxu0 0.0
    %138 = vmatpush1.msra.mxu0 0.0
    %139 = vmatprep.subr.mxu0 0.0
    %140 = vmatpush1.msra.mxu0 0.0
    %141 = vmatprep.subr.mxu0 0.0
    %142 = vmatpush1.msra.mxu0 0.0
    %143 = vmatprep.subr.mxu0 0.0
    %144 = vmatpush1.msra.mxu0 0.0
    %145 = vmatprep.subr.mxu0 0.0
    %146 = vmatpush1.msra.mxu0 0.0
    %147 = vmatprep.subr.mxu0 0.0
    %148 = vmatpush1.msra.mxu0 0.0
    %149 = vmatprep.subr.mxu0 0.0
    %150 = vmatpush1.msra.mxu0 0.0
    %151 = vmatprep.subr.mxu0 0.0
    %152 = vmatpush1.msra.mxu0 0.0
    %153 = vmatprep.subr.mxu0 0.0
    %154 = vmatpush1.msra.mxu0 0.0
    %155 = vmatprep.subr.mxu0 0.0
    %156 = vmatpush1.msra.mxu0 0.0
    %157 = vmatprep.subr.mxu0 0.0
    %158 = vmatpush1.msra.mxu0 0.0
    %159 = vmatprep.subr.mxu0 0.0
    %160 = vmatpush1.msra.mxu0 0.0
    %161 = vmatprep.subr.mxu0 0.0
    %162 = vmatpush1.msra.mxu0 0.0
    %163 = vmatprep.subr.mxu0 0.0
    %164 = vmatpush1.msra.mxu0 0.0
    %165 = vmatprep.subr.mxu0 0.0
    %166 = vmatpush1.msra.mxu0 0.0
    %167 = vmatprep.subr.mxu0 0.0
    %168 = vmatpush1.msra.mxu0 0.0
    %169 = vmatprep.subr.mxu0 0.0
    %170 = vmatpush1.msra.mxu0 0.0
    %171 = vmatprep.subr.mxu0 0.0
    %172 = vmatpush1.msra.mxu0 0.0
    %173 = vmatprep.subr.mxu0 0.0
    %174 = vmatpush1.msra.mxu0 0.0
    %175 = vmatprep.subr.mxu0 0.0
    %176 = vmatpush1.msra.mxu0 0.0
    %177 = vmatprep.subr.mxu0 0.0
    %178 = vmatpush1.msra.mxu0 0.0
    %179 = vmatprep.mubr.f32.mxu0 0.0
    %180 = vmatmul.mubr.f32.gmra.mrb[0].mxu0 %v104
    %v181 = vpop.f32.mrb[0].mxu0
    %v182 = vadd.f32 0.0, %v181
    %v183 = vpop.f32.mrb[0].mxu0
    %184 = vmatprep.mubr.f32.mxu0 0.0
    %185 = vmatmul.mubr.f32.gmra.mrb[0].mxu0 %v107
    %v186 = vpop.f32.mrb[0].mxu0
    %v187 = vadd.f32 0.0, %v186
    %v188 = vpop.f32.mrb[0].mxu0
    %189 = vmatprep.mubr.f32.mxu0 0.0
    %190 = vmatmul.mubr.f32.gmra.mrb[0].mxu0 %v110
    %v191 = vpop.f32.mrb[0].mxu0
    %v192 = vadd.f32 0.0, %v191
    %v193 = vpop.f32.mrb[0].mxu0
    %194 = vmatprep.mubr.f32.mxu0 0.0
    %195 = vmatmul.mubr.f32.gmra.mrb[0].mxu0 %v113
    %v196 = vpop.f32.mrb[0].mxu0
    %v197 = vadd.f32 0.0, %v196
    %v198 = vpop.f32.mrb[0].mxu0
    %199 = vdwg.mxu0
    %vm200 = vcmp.gt.f32.partialorder %v182, 0.0
    %vm201 = vcmp.gt.f32.partialorder %v187, 0.0
    %vm202 = vcmp.gt.f32.partialorder %v192, 0.0
    %vm203 = vcmp.gt.f32.partialorder %v197, 0.0
    %v204 = vrcp.pop %v182
    %v205 = vmul.f32 1.0, %v204
    %v206 = vrcp.pop %v187
    %v207 = vmul.f32 1.0, %v206
    %v208 = vrcp.pop %v192
    %v209 = vmul.f32 1.0, %v208
    %v210 = vrcp.pop %v197
    %v211 = vmul.f32 1.0, %v210
    %v212 = vsel %vm200, %v205, 0.0
    %v213 = vsel %vm201, %v207, 0.0
    %v214 = vsel %vm202, %v209, 0.0
    %v215 = vsel %vm203, %v211, 0.0
    %217 = vset.pattern.permute.xlu0 127
    %218 = vperm.xlu0 %217, %v212
    %v219 = vpop.permute.xlu0 %218
    %222 = vset.pattern.permute.xlu0 127
    %223 = vperm.xlu0 %222, %v213
    %v224 = vpop.permute.xlu0 %223
    %227 = vset.pattern.permute.xlu0 127
    %228 = vperm.xlu0 %227, %v214
    %v229 = vpop.permute.xlu0 %228
    %232 = vset.pattern.permute.xlu0 127
    %233 = vperm.xlu0 %232, %v215
    %v234 = vpop.permute.xlu0 %233
    %v236 = vmul.f32 %v182, %v219
    %v237 = vmul.f32 %v187, %v224
    %v238 = vmul.f32 %v192, %v229
    %v239 = vmul.f32 %v197, %v234
    %v240 = vld [vmem:[#allocation5] sm:$0xff]
    %v241 = vld [vmem:[#allocation5 + $0x8] sm:$0xff]
    %v242 = vld [vmem:[#allocation5 + $0x10] sm:$0xff]
    %v243 = vld [vmem:[#allocation5 + $0x18] sm:$0xff]
    %v244 = vld [vmem:[#allocation5 + $0x20] sm:$0xff]
    %v245 = vld [vmem:[#allocation5 + $0x28] sm:$0xff]
    %v246 = vld [vmem:[#allocation5 + $0x30] sm:$0xff]
    %v247 = vld [vmem:[#allocation5 + $0x38] sm:$0xff]
    %v248 = vld [vmem:[#allocation5 + $0x40] sm:$0xff]
    %v249 = vld [vmem:[#allocation5 + $0x48] sm:$0xff]
    %v250 = vld [vmem:[#allocation5 + $0x50] sm:$0xff]
    %v251 = vld [vmem:[#allocation5 + $0x58] sm:$0xff]
    %v252 = vld [vmem:[#allocation5 + $0x60] sm:$0xff]
    %v253 = vld [vmem:[#allocation5 + $0x68] sm:$0xff]
    %v254 = vld [vmem:[#allocation5 + $0x70] sm:$0xff]
    %v255 = vld [vmem:[#allocation5 + $0x78] sm:$0xff]
    %256 = vmatprep.subr.mxu0 0.0
    %257 = vmatpush1.msra.mxu0 %v240
    %258 = vmatprep.subr.mxu0 0.0
    %259 = vmatpush1.msra.mxu0 %v241
    %260 = vmatprep.subr.mxu0 0.0
    %261 = vmatpush1.msra.mxu0 %v242
    %262 = vmatprep.subr.mxu0 0.0
    %263 = vmatpush1.msra.mxu0 %v243
    %264 = vmatprep.subr.mxu0 0.0
    %265 = vmatpush1.msra.mxu0 %v244
    %266 = vmatprep.subr.mxu0 0.0
    %267 = vmatpush1.msra.mxu0 %v245
    %268 = vmatprep.subr.mxu0 0.0
    %269 = vmatpush1.msra.mxu0 %v246
    %270 = vmatprep.subr.mxu0 0.0
    %271 = vmatpush1.msra.mxu0 %v247
    %272 = vmatprep.subr.mxu0 0.0
    %273 = vmatpush1.msra.mxu0 %v248
    %274 = vmatprep.subr.mxu0 0.0
    %275 = vmatpush1.msra.mxu0 %v249
    %276 = vmatprep.subr.mxu0 0.0
    %277 = vmatpush1.msra.mxu0 %v250
    %278 = vmatprep.subr.mxu0 0.0
    %279 = vmatpush1.msra.mxu0 %v251
    %280 = vmatprep.subr.mxu0 0.0
    %281 = vmatpush1.msra.mxu0 %v252
    %282 = vmatprep.subr.mxu0 0.0
    %283 = vmatpush1.msra.mxu0 %v253
    %284 = vmatprep.subr.mxu0 0.0
    %285 = vmatpush1.msra.mxu0 %v254
    %286 = vmatprep.subr.mxu0 0.0
    %287 = vmatpush1.msra.mxu0 %v255
    %288 = vmatprep.subr.mxu0 0.0
    %289 = vmatpush1.msra.mxu0 0.0
    %290 = vmatprep.subr.mxu0 0.0
    %291 = vmatpush1.msra.mxu0 0.0
    %292 = vmatprep.subr.mxu0 0.0
    %293 = vmatpush1.msra.mxu0 0.0
    %294 = vmatprep.subr.mxu0 0.0
    %295 = vmatpush1.msra.mxu0 0.0
    %296 = vmatprep.subr.mxu0 0.0
    %297 = vmatpush1.msra.mxu0 0.0
    %298 = vmatprep.subr.mxu0 0.0
    %299 = vmatpush1.msra.mxu0 0.0
    %300 = vmatprep.subr.mxu0 0.0
    %301 = vmatpush1.msra.mxu0 0.0
    %302 = vmatprep.subr.mxu0 0.0
    %303 = vmatpush1.msra.mxu0 0.0
    %304 = vmatprep.subr.mxu0 0.0
    %305 = vmatpush1.msra.mxu0 0.0
    %306 = vmatprep.subr.mxu0 0.0
    %307 = vmatpush1.msra.mxu0 0.0
    %308 = vmatprep.subr.mxu0 0.0
    %309 = vmatpush1.msra.mxu0 0.0
    %310 = vmatprep.subr.mxu0 0.0
    %311 = vmatpush1.msra.mxu0 0.0
    %312 = vmatprep.subr.mxu0 0.0
    %313 = vmatpush1.msra.mxu0 0.0
    %314 = vmatprep.subr.mxu0 0.0
    %315 = vmatpush1.msra.mxu0 0.0
    %316 = vmatprep.subr.mxu0 0.0
    %317 = vmatpush1.msra.mxu0 0.0
    %318 = vmatprep.subr.mxu0 0.0
    %319 = vmatpush1.msra.mxu0 0.0
    %320 = vmatprep.mubr.f32.mxu0 0.0
    %321 = vmatmul.mubr.f32.gmra.mrb[0].mxu0 %v236
    %v322 = vpop.f32.mrb[0].mxu0
    %v323 = vadd.f32 0.0, %v322
    %v324 = vpop.f32.mrb[0].mxu0
    %325 = vmatprep.mubr.f32.mxu0 0.0
    %326 = vmatmul.mubr.f32.gmra.mrb[0].mxu0 %v237
    %v327 = vpop.f32.mrb[0].mxu0
    %v328 = vadd.f32 0.0, %v327
    %v329 = vpop.f32.mrb[0].mxu0
    %330 = vmatprep.mubr.f32.mxu0 0.0
    %331 = vmatmul.mubr.f32.gmra.mrb[0].mxu0 %v238
    %v332 = vpop.f32.mrb[0].mxu0
    %v333 = vadd.f32 0.0, %v332
    %v334 = vpop.f32.mrb[0].mxu0
    %335 = vmatprep.mubr.f32.mxu0 0.0
    %336 = vmatmul.mubr.f32.gmra.mrb[0].mxu0 %v239
    %v337 = vpop.f32.mrb[0].mxu0
    %v338 = vadd.f32 0.0, %v337
    %v339 = vpop.f32.mrb[0].mxu0
    %340 = vdwg.mxu0
    %vm341 = vcmask 261120
    %v342 = vsel %vm341, %v54, 0.0
    %343 = vadd.xlane.f32.xlu0 %v342
    %v344 = vpop.xlane.xlu0 %343
    %v345 = vsel %vm341, %v55, 0.0
    %346 = vadd.xlane.f32.xlu0 %v345
    %v347 = vpop.xlane.xlu0 %346
    %v348 = vsel %vm341, %v56, 0.0
    %349 = vadd.xlane.f32.xlu0 %v348
    %v350 = vpop.xlane.xlu0 %349
    %v351 = vsel %vm341, %v57, 0.0
    %352 = vadd.xlane.f32.xlu0 %v351
    %v353 = vpop.xlane.xlu0 %352
    %v354 = vsel %vm341, %v58, 0.0
    %355 = vadd.xlane.f32.xlu0 %v354
    %v356 = vpop.xlane.xlu0 %355
    %v357 = vsel %vm341, %v59, 0.0
    %358 = vadd.xlane.f32.xlu0 %v357
    %v359 = vpop.xlane.xlu0 %358
    %v360 = vsel %vm341, %v60, 0.0
    %361 = vadd.xlane.f32.xlu0 %v360
    %v362 = vpop.xlane.xlu0 %361
    %v363 = vsel %vm341, %v61, 0.0
    %364 = vadd.xlane.f32.xlu0 %v363
    %v365 = vpop.xlane.xlu0 %364
    %vm366 = vcmp.gt.f32.partialorder %v344, 0.0
    %vm367 = vcmp.gt.f32.partialorder %v347, 0.0
    %vm368 = vcmp.gt.f32.partialorder %v350, 0.0
    %vm369 = vcmp.gt.f32.partialorder %v353, 0.0
    %vm370 = vcmp.gt.f32.partialorder %v356, 0.0
    %vm371 = vcmp.gt.f32.partialorder %v359, 0.0
    %vm372 = vcmp.gt.f32.partialorder %v362, 0.0
    %vm373 = vcmp.gt.f32.partialorder %v365, 0.0
    %v374 = vrcp.pop %v344
    %v375 = vmul.f32 1.0, %v374
    %v376 = vrcp.pop %v347
    %v377 = vmul.f32 1.0, %v376
    %v378 = vrcp.pop %v350
    %v379 = vmul.f32 1.0, %v378
    %v380 = vrcp.pop %v353
    %v381 = vmul.f32 1.0, %v380
    %v382 = vrcp.pop %v356
    %v383 = vmul.f32 1.0, %v382
    %v384 = vrcp.pop %v359
    %v385 = vmul.f32 1.0, %v384
    %v386 = vrcp.pop %v362
    %v387 = vmul.f32 1.0, %v386
    %v388 = vrcp.pop %v365
    %v389 = vmul.f32 1.0, %v388
    %v390 = vsel %vm366, %v375, 0.0
    %v391 = vsel %vm367, %v377, 0.0
    %v392 = vsel %vm368, %v379, 0.0
    %v393 = vsel %vm369, %v381, 0.0
    %v394 = vsel %vm370, %v383, 0.0
    %v395 = vsel %vm371, %v385, 0.0
    %v396 = vsel %vm372, %v387, 0.0
    %v397 = vsel %vm373, %v389, 0.0
    %v399 = vsel %vm341, %v54, 0
    %v402 = vsel %vm341, %v55, 0
    %v405 = vsel %vm341, %v56, 0
    %v408 = vsel %vm341, %v57, 0
    %v411 = vsel %vm341, %v58, 0
    %v414 = vsel %vm341, %v59, 0
    %v417 = vsel %vm341, %v60, 0
    %v420 = vsel %vm341, %v61, 0
    %422 = vmatprep.subr.mxu0 0.0
    %423 = vmatpush1.msra.mxu0 %v323
    %424 = vmatprep.subr.mxu0 0.0
    %425 = vmatpush1.msra.mxu0 %v328
    %426 = vmatprep.subr.mxu0 0.0
    %427 = vmatpush1.msra.mxu0 %v333
    %428 = vmatprep.subr.mxu0 0.0
    %429 = vmatpush1.msra.mxu0 %v338
    %430 = vmatprep.subr.mxu0 0.0
    %431 = vmatpush1.msra.mxu0 0.0
    %432 = vmatprep.subr.mxu0 0.0
    %433 = vmatpush1.msra.mxu0 0.0
    %434 = vmatprep.subr.mxu0 0.0
    %435 = vmatpush1.msra.mxu0 0.0
    %436 = vmatprep.subr.mxu0 0.0
    %437 = vmatpush1.msra.mxu0 0.0
    %438 = vmatprep.subr.mxu0 0.0
    %439 = vmatpush1.msra.mxu0 0.0
    %440 = vmatprep.subr.mxu0 0.0
    %441 = vmatpush1.msra.mxu0 0.0
    %442 = vmatprep.subr.mxu0 0.0
    %443 = vmatpush1.msra.mxu0 0.0
    %444 = vmatprep.subr.mxu0 0.0
    %445 = vmatpush1.msra.mxu0 0.0
    %446 = vmatprep.subr.mxu0 0.0
    %447 = vmatpush1.msra.mxu0 0.0
    %448 = vmatprep.subr.mxu0 0.0
    %449 = vmatpush1.msra.mxu0 0.0
    %450 = vmatprep.subr.mxu0 0.0
    %451 = vmatpush1.msra.mxu0 0.0
    %452 = vmatprep.subr.mxu0 0.0
    %453 = vmatpush1.msra.mxu0 0.0
    %454 = vmatprep.subr.mxu0 0.0
    %455 = vmatpush1.msra.mxu0 0.0
    %456 = vmatprep.subr.mxu0 0.0
    %457 = vmatpush1.msra.mxu0 0.0
    %458 = vmatprep.subr.mxu0 0.0
    %459 = vmatpush1.msra.mxu0 0.0
    %460 = vmatprep.subr.mxu0 0.0
    %461 = vmatpush1.msra.mxu0 0.0
    %462 = vmatprep.subr.mxu0 0.0
    %463 = vmatpush1.msra.mxu0 0.0
    %464 = vmatprep.subr.mxu0 0.0
    %465 = vmatpush1.msra.mxu0 0.0
    %466 = vmatprep.subr.mxu0 0.0
    %467 = vmatpush1.msra.mxu0 0.0
    %468 = vmatprep.subr.mxu0 0.0
    %469 = vmatpush1.msra.mxu0 0.0
    %470 = vmatprep.subr.mxu0 0.0
    %471 = vmatpush1.msra.mxu0 0.0
    %472 = vmatprep.subr.mxu0 0.0
    %473 = vmatpush1.msra.mxu0 0.0
    %474 = vmatprep.subr.mxu0 0.0
    %475 = vmatpush1.msra.mxu0 0.0
    %476 = vmatprep.subr.mxu0 0.0
    %477 = vmatpush1.msra.mxu0 0.0
    %478 = vmatprep.subr.mxu0 0.0
    %479 = vmatpush1.msra.mxu0 0.0
    %480 = vmatprep.subr.mxu0 0.0
    %481 = vmatpush1.msra.mxu0 0.0
    %482 = vmatprep.subr.mxu0 0.0
    %483 = vmatpush1.msra.mxu0 0.0
    %484 = vmatprep.subr.mxu0 0.0
    %485 = vmatpush1.msra.mxu0 0.0
    %486 = vmatprep.mubr.f32.mxu0 0.0
    %487 = vmatmul.mubr.f32.gmra.mrb[0].mxu0 %v399
    %v488 = vpop.f32.mrb[0].mxu0
    %v489 = vadd.f32 0.0, %v488
    %v490 = vpop.f32.mrb[0].mxu0
    %491 = vmatprep.mubr.f32.mxu0 0.0
    %492 = vmatmul.mubr.f32.gmra.mrb[0].mxu0 %v402
    %v493 = vpop.f32.mrb[0].mxu0
    %v494 = vadd.f32 0.0, %v493
    %v495 = vpop.f32.mrb[0].mxu0
    %496 = vmatprep.mubr.f32.mxu0 0.0
    %497 = vmatmul.mubr.f32.gmra.mrb[0].mxu0 %v405
    %v498 = vpop.f32.mrb[0].mxu0
    %v499 = vadd.f32 0.0, %v498
    %v500 = vpop.f32.mrb[0].mxu0
    %501 = vmatprep.mubr.f32.mxu0 0.0
    %502 = vmatmul.mubr.f32.gmra.mrb[0].mxu0 %v408
    %v503 = vpop.f32.mrb[0].mxu0
    %v504 = vadd.f32 0.0, %v503
    %v505 = vpop.f32.mrb[0].mxu0
    %506 = vmatprep.mubr.f32.mxu0 0.0
    %507 = vmatmul.mubr.f32.gmra.mrb[0].mxu0 %v411
    %v508 = vpop.f32.mrb[0].mxu0
    %v509 = vadd.f32 0.0, %v508
    %v510 = vpop.f32.mrb[0].mxu0
    %511 = vmatprep.mubr.f32.mxu0 0.0
    %512 = vmatmul.mubr.f32.gmra.mrb[0].mxu0 %v414
    %v513 = vpop.f32.mrb[0].mxu0
    %v514 = vadd.f32 0.0, %v513
    %v515 = vpop.f32.mrb[0].mxu0
    %516 = vmatprep.mubr.f32.mxu0 0.0
    %517 = vmatmul.mubr.f32.gmra.mrb[0].mxu0 %v417
    %v518 = vpop.f32.mrb[0].mxu0
    %v519 = vadd.f32 0.0, %v518
    %v520 = vpop.f32.mrb[0].mxu0
    %521 = vmatprep.mubr.f32.mxu0 0.0
    %522 = vmatmul.mubr.f32.gmra.mrb[0].mxu0 %v420
    %v523 = vpop.f32.mrb[0].mxu0
    %v524 = vadd.f32 0.0, %v523
    %v525 = vpop.f32.mrb[0].mxu0
    %526 = vdwg.mxu0
    %v527 = vmul.f32 %v489, %v390
    %v528 = vmul.f32 %v494, %v391
    %v529 = vmul.f32 %v499, %v392
    %v530 = vmul.f32 %v504, %v393
    %v531 = vmul.f32 %v509, %v394
    %v532 = vmul.f32 %v514, %v395
    %v533 = vmul.f32 %v519, %v396
    %v534 = vmul.f32 %v524, %v397
    %v535 = vld [vmem:[%s3] sm:$0x1]
    %v537 = vlaneseq
    %v538 = vshrl.u32 %v537, 7
    %v539 = vsub.s32 0, %v538
    %v540 = vrot.slane %v535, %v539
    %v542 = vadd.f32 %v527, %v540
    %v543 = vadd.f32 %v528, %v540
    %v544 = vadd.f32 %v529, %v540
    %v545 = vadd.f32 %v530, %v540
    %v546 = vadd.f32 %v531, %v540
    %v547 = vadd.f32 %v532, %v540
    %v548 = vadd.f32 %v533, %v540
    %v549 = vadd.f32 %v534, %v540
    %550 = vst [vmem:[#allocation7] sm:$0xff] %v542
    %551 = vst [vmem:[#allocation7 + $0x8] sm:$0xff] %v543
    %552 = vst [vmem:[#allocation7 + $0x10] sm:$0xff] %v544
    %553 = vst [vmem:[#allocation7 + $0x18] sm:$0xff] %v545
    %554 = vst [vmem:[#allocation7 + $0x20] sm:$0xff] %v546
    %555 = vst [vmem:[#allocation7 + $0x28] sm:$0xff] %v547
    %556 = vst [vmem:[#allocation7 + $0x30] sm:$0xff] %v548
    %557 = vst [vmem:[#allocation7 + $0x38] sm:$0xff] %v549
    // Predicated region
    $region26: #{tpu_custom_call.1} parent=1 // pred_check
      _
    $region27: #{tpu_custom_call.1} parent=1 // pred_check_branch
      %559 = sbr.rel (0) target = $region29
    $region28: #{tpu_custom_call.1} parent=1 // pred_region
      %s561 = ssub.s32 1024, 1024
      %562 = vsyncadd [#allocation4], %s561
      %s563 = sshll.u32 [#allocation7], 4
      %s564 = int_to_ptr.vmem [resolvable:$true] %s563
      %569 = dma.vmem_to_hbm [thread:$0]  %s564, 1024, %s4, [#allocation4], 128, 128, 8
    $region29: #{tpu_custom_call.1} parent=1 // pred_fallthru
      _
    // Predicated region
    $region30: #{tpu_custom_call.1} parent=1 // pred_check
      _
    $region31: #{tpu_custom_call.1} parent=1 // pred_check_branch
      %571 = sbr.rel (0) target = $region33
    $region32: #{tpu_custom_call.1} parent=1 // pred_region
      %572 = dma.done [#allocation4], 1024
    $region33: #{tpu_custom_call.1} parent=1 // pred_fallthru
      _
    %573 = vsyncpa [#allocation3], 1
    %574 = vsyncpa [#allocation6], 1
    %575 = vsyncpa [#allocation4], 1

</llo_original>
